<compile_context>
chip_gen: v6e
topology: v6e:2x2x1
jax: 0.10.0
libtpu: 0.0.40
codegen_flags: <defaults>
</compile_context>

<pallas_src>
import numpy as np
import jax
import jax.numpy as jnp
from jax.experimental import pallas as pl
from jax.experimental.pallas import tpu as pltpu


def _ride_loss_kernel(tgt_ref, side_ref, invt_ref, pagg_ref, xy_ref, x_ref,
                      oce_ref, okl_ref):
    """One (batch-tile, expert) grid step.

    Accumulates per batch row, summed over experts, directly into the resident
    (same block index for every expert) output blocks:
      oce += w[y] * ( logsumexp(x - m[y]*s*onehot) - (x[y] - m[y]*s) )   # LDAM CE
      okl += sum_c p_agg[c] * log_softmax(x / T)[c]                      # KL piece
    """
    e = pl.program_id(1)

    @pl.when(e == 0)
    def _init():
        oce_ref[...] = jnp.zeros_like(oce_ref)
        okl_ref[...] = jnp.zeros_like(okl_ref)

    x = x_ref[...]                        # (TN, C) this expert's logits (f32)
    tn, c = x.shape

    tgt = tgt_ref[...]                    # (TN, 1) int32 targets
    m_s = side_ref[:, 0:1]                # (TN, 1) LDAM margin m[y] * s
    w_b = side_ref[:, 1:2]                # (TN, 1) CE sample weight (0 on padded rows)
    psum = side_ref[:, 2:3]               # (TN, 1) row-sum of p_agg (0 on padded rows)
    xy = xy_ref[...]                      # (TN, 1) x[n, y_n]  (wrapper gather)

    # ---- LDAM-margin weighted cross entropy (per-row) ----
    col = jax.lax.broadcasted_iota(jnp.int32, (tn, c), 1)
    final = jnp.where(col == tgt, x - m_s, x)            # margin only on target lane
    fmax = jnp.max(final, axis=-1, keepdims=True)
    lse_f = fmax + jnp.log(jnp.sum(jnp.exp(final - fmax), axis=-1, keepdims=True))
    oce_ref[...] += w_b * (lse_f - (xy - m_s))

    # ---- diversity piece: sum_c p_agg * log_softmax(x / T) ----
    xs = x * invt_ref[...]
    smax = jnp.max(xs, axis=-1, keepdims=True)
    lse_s = smax + jnp.log(jnp.sum(jnp.exp(xs - smax), axis=-1, keepdims=True))
    okl_ref[...] += jnp.sum(pagg_ref[...] * xs, axis=-1, keepdims=True) - lse_s * psum


def _pick_tile(N, C, max_tile_n=1024):
    """VMEM-aware batch-tile size that divides the 8-padded batch."""
    try:
        info = pltpu.get_tpu_info()
        vmem_cap = int(getattr(info, "vmem_capacity_bytes", 64 * 1024 * 1024))
    except Exception:
        vmem_cap = 64 * 1024 * 1024          # assume the smallest (v7x-like) if unknown
    # ~102 MiB scoped limit on v5e/v6e (128 MiB physical), ~51 MiB on v7x (64 MiB).
    vmem_limit = min(int(vmem_cap * 0.8), 112 * 1024 * 1024)

    # Declared double-buffered bytes per batch row: expert logits + p_agg dominate
    # (2 bufs x 2 streams x 4*C) plus five lane-padded (tn,1)/(tn,128) side/out buffers.
    # Keep declared buffers to ~55% of the limit; the rest is Mosaic temporaries.
    bytes_per_row = 16 * C + 6144
    budget = int(vmem_limit * 0.55) - 64 * C
    tn_cap = max(8, min(max_tile_n, budget // bytes_per_row))
    tn_cap = max(8, (tn_cap // 8) * 8)

    n8 = ((N + 7) // 8) * 8
    if n8 >= 16:                             # >= 2 tiles so v7x's two cores both get work
        tn_cap = min(tn_cap, (((n8 + 1) // 2 + 7) // 8) * 8)

    tn = 8
    t = max(8, min(tn_cap, n8))
    t = (t // 8) * 8
    while t >= 8:                            # largest multiple of 8 dividing n8
        if n8 % t == 0:
            tn = t
            break
        t -= 8
    return tn, n8, vmem_limit


def ride_loss_pallas(expert_logits, output_logits, targets, *,
                     m_list=None, per_cls_weights_base=None,
                     per_cls_weights_diversity=None,
                     s=30.0, base_loss_factor=1.0,
                     additional_diversity_factor=-0.2,
                     base_diversity_temperature=1.0,
                     max_tile_n=1024):
    """RIDELoss.forward with extra_info['logits'] = expert_logits of shape (E, N, C)."""
    expert_logits = jnp.asarray(expert_logits, jnp.float32)
    output_logits = jnp.asarray(output_logits, jnp.float32)
    targets = jnp.asarray(targets, jnp.int32)
    E, N, C = expert_logits.shape

    diversity_off = (additional_diversity_factor == 0.0)
    if diversity_off:
        # torch: ride_loss_logits = output_logits for every expert; KL term * 0.
        ce_stream = output_logits[None]      # (1, N, C): no E-fold broadcast copy
        ce_mult = float(E)
    else:
        ce_stream = expert_logits
        ce_mult = 1.0
    E_eff = ce_stream.shape[0]

    # per-class diversity temperature and its mean (matches the torch code)
    if per_cls_weights_diversity is not None:
        temp = base_diversity_temperature * jnp.asarray(per_cls_weights_diversity,
                                                        jnp.float32)
        temp_mean = jnp.mean(temp)
    else:
        temp = jnp.full((C,), base_diversity_temperature, jnp.float32)
        temp_mean = jnp.float32(base_diversity_temperature)
    inv_t = (1.0 / temp).reshape(1, C)

    # aggregated softmax + sum p*log p hoisted to the wrapper (one tiny XLA pass)
    if diversity_off:
        p_agg = jnp.zeros((N, C), jnp.float32)
        p_rowsum = jnp.zeros((N, 1), jnp.float32)
        plogp_total = jnp.float32(0.0)
    else:
        logp_agg = jax.nn.log_softmax(output_logits * inv_t, axis=-1)
        p_agg = jnp.exp(logp_agg)
        plogp_total = jnp.sum(p_agg * logp_agg)
        p_rowsum = jnp.sum(p_agg, axis=-1, keepdims=True)

    # per-sample LDAM margin m[y]*s and CE class weight (wrapper-side gathers)
    if m_list is not None:
        m_s = (jnp.asarray(m_list, jnp.float32)[targets] * jnp.float32(s)).reshape(N, 1)
    else:
        m_s = jnp.zeros((N, 1), jnp.float32)
    if (m_list is not None) and (per_cls_weights_base is not None):
        w_b = jnp.asarray(per_cls_weights_base, jnp.float32)[targets].reshape(N, 1)
    else:
        w_b = jnp.ones((N, 1), jnp.float32)
    ce_denom = jnp.sum(w_b)   # F.cross_entropy(weight=w, reduction='mean') denominator

    # target-logit gather x[e, n, y_n] (E_eff * N scalars)
    xy = jnp.take_along_axis(
        ce_stream, jnp.broadcast_to(targets[None, :, None], (E_eff, N, 1)), axis=2)

    # ---- VMEM-aware tiling ----
    tn, n8, vmem_limit = _pick_tile(N, C, max_tile_n=max_tile_n)
    num_tiles = n8 // tn
    rpad = n8 - N

    # packed per-row side array: [m[y]*s, w[y], sum_c p_agg] -> one lane-dense DMA/tile
    side = jnp.zeros((n8, 128), jnp.float32)
    side = side.at[:N, 0:1].set(m_s)
    side = side.at[:N, 1:2].set(w_b)
    side = side.at[:N, 2:3].set(p_rowsum)

    tgt2 = jnp.pad(targets.reshape(N, 1), ((0, rpad), (0, 0)))
    xy_p = jnp.pad(xy, ((0, 0), (0, rpad), (0, 0)))
    p_agg_p = jnp.pad(p_agg, ((0, rpad), (0, 0)))
    if rpad:
        # TODO(synk): when N is not a multiple of 8 this makes one row-padded copy of the
        # expert logits; batches that are multiples of 8 take the zero-copy path.
        x_p = jnp.pad(ce_stream, ((0, 0), (0, rpad), (0, 0)))
    else:
        x_p = ce_stream

    grid_spec = pltpu.PrefetchScalarGridSpec(
        num_scalar_prefetch=0,
        grid=(num_tiles, E_eff),
        in_specs=[
            pl.BlockSpec((tn, 1), lambda n, e: (n, 0)),            # targets (int32)
            pl.BlockSpec((tn, 128), lambda n, e: (n, 0)),          # packed side scalars
            pl.BlockSpec((1, C), lambda n, e: (0, 0)),             # 1 / T per class
            pl.BlockSpec((tn, C), lambda n, e: (n, 0)),            # p_agg (const in e)
            pl.BlockSpec((None, tn, 1), lambda n, e: (e, n, 0)),   # x[n, y] per expert
            pl.BlockSpec((None, tn, C), lambda n, e: (e, n, 0)),   # expert logits
        ],
        out_specs=[
            pl.BlockSpec((tn, 1), lambda n, e: (n, 0)),            # per-row CE partials
            pl.BlockSpec((tn, 1), lambda n, e: (n, 0)),            # per-row sum p*log q
        ],
    )

    out_ce, out_kl = pl.pallas_call(
        _ride_loss_kernel,
        out_shape=(jax.ShapeDtypeStruct((n8, 1), jnp.float32),
                   jax.ShapeDtypeStruct((n8, 1), jnp.float32)),
        grid_spec=grid_spec,
        compiler_params=pltpu.CompilerParams(
            dimension_semantics=("parallel", "arbitrary"),
            vmem_limit_bytes=vmem_limit),
    )(tgt2, side, inv_t, p_agg_p, xy_p, x_p)

    ce_term = jnp.float32(base_loss_factor * ce_mult) * jnp.sum(out_ce) / ce_denom
    if diversity_off:
        return ce_term
    # KL_total = sum_e sum p*(log p - log q_e) = E * sum p*log p - sum_e sum p*log q_e
    kl_sum = jnp.float32(E) * plogp_total - jnp.sum(out_kl)
    kl_term = (jnp.float32(additional_diversity_factor) * temp_mean * temp_mean
               * kl_sum / jnp.float32(N))
    return ce_term + kl_term


def _ride_loss_reference(expert_logits, output_logits, targets, *, m_list, w_base,
                         w_div, s, base_loss_factor, additional_diversity_factor,
                         base_diversity_temperature):
    """Pure-JAX mirror of the PyTorch RIDELoss.forward (for validation)."""
    E, N, C = expert_logits.shape
    onehot = jax.nn.one_hot(targets, C, dtype=jnp.float32)
    m_s = (m_list[targets] * s)[:, None] if m_list is not None else jnp.zeros((N, 1))
    if w_base is not None:
        w = w_base[targets]
        denom = jnp.sum(w)
    else:
        w = jnp.ones((N,), jnp.float32)
        denom = jnp.float32(N)
    if w_div is not None:
        T = base_diversity_temperature * w_div
        t_mean = jnp.mean(T)
    else:
        T = jnp.full((C,), base_diversity_temperature, jnp.float32)
        t_mean = jnp.float32(base_diversity_temperature)
    logp_agg = jax.nn.log_softmax(output_logits / T[None, :], axis=-1)
    p_agg = jnp.exp(logp_agg)
    loss = jnp.float32(0.0)
    for e in range(E):
        x = expert_logits[e]
        final = x - onehot * m_s
        ce = -jnp.sum(onehot * jax.nn.log_softmax(final, axis=-1), axis=-1)
        loss = loss + base_loss_factor * jnp.sum(w * ce) / denom
        logq = jax.nn.log_softmax(x / T[None, :], axis=-1)
        kl = jnp.sum(p_agg * (logp_agg - logq)) / N
        loss = loss + additional_diversity_factor * t_mean * t_mean * kl
    return loss


if __name__ == "__main__":
    # TODO(synk): Focal_Loss is instantiated by RIDELoss but never used in forward; the
    # extra_info=None branch and the epoch-reweight hook are host-side configuration
    # handled by the wrapper arguments, not inside the kernel.
    key = jax.random.PRNGKey(0)
    E, N, C = 3, 64, 10
    k1, k2 = jax.random.split(key)
    expert_logits = 2.0 * jax.random.normal(k1, (E, N, C), jnp.float32)
    output_logits = jnp.mean(expert_logits, axis=0)          # aggregated logits
    targets = jax.random.randint(k2, (N,), 0, C)

    # host-side constants mirroring RIDELoss.__init__ / _hook_before_epoch (reweight on)
    cls_num_list = np.array([100, 60, 40, 30, 20, 15, 10, 8, 5, 3], np.float64)
    max_m, s_scale, reweight_factor, beta = 0.5, 30.0, 0.05, 0.9999
    m_list = 1.0 / np.sqrt(np.sqrt(cls_num_list))
    m_list = m_list * (max_m / m_list.max())
    eff = 1.0 - np.power(beta, cls_num_list)
    w_base = (1.0 - beta) / eff
    w_base = w_base / w_base.sum() * len(cls_num_list)
    frac = cls_num_list / cls_num_list.sum()
    w_div = len(cls_num_list) * frac * reweight_factor + 1.0 - reweight_factor
    w_div = w_div / w_div.max()

    m_list_j = jnp.asarray(m_list, jnp.float32)
    w_base_j = jnp.asarray(w_base, jnp.float32)
    w_div_j = jnp.asarray(w_div, jnp.float32)

    loss = ride_loss_pallas(expert_logits, output_logits, targets,
                            m_list=m_list_j, per_cls_weights_base=w_base_j,
                            per_cls_weights_diversity=w_div_j,
                            s=s_scale, base_loss_factor=1.0,
                            additional_diversity_factor=-0.2,
                            base_diversity_temperature=1.0)
    loss = jax.block_until_ready(loss)

    ref = _ride_loss_reference(expert_logits, output_logits, targets,
                               m_list=m_list_j, w_base=w_base_j, w_div=w_div_j,
                               s=s_scale, base_loss_factor=1.0,
                               additional_diversity_factor=-0.2,
                               base_diversity_temperature=1.0)
    np.testing.assert_allclose(np.asarray(loss), np.asarray(ref), rtol=2e-3, atol=2e-3)
    print("KERNEL_OK")
</pallas_src>

<mosaic_0001>
module attributes {stable_mosaic.version = 11 : i64} {
  func.func @_ride_loss_kernel(%arg0: i32, %arg1: i32, %arg2: memref<32x1xi32, #tpu.memory_space<vmem>>, %arg3: memref<32x128xf32, #tpu.memory_space<vmem>>, %arg4: memref<1x10xf32, #tpu.memory_space<vmem>>, %arg5: memref<32x10xf32, #tpu.memory_space<vmem>>, %arg6: memref<1x32x1xf32, #tpu.memory_space<vmem>>, %arg7: memref<1x32x10xf32, #tpu.memory_space<vmem>>, %arg8: memref<32x1xf32, #tpu.memory_space<vmem>>, %arg9: memref<32x1xf32, #tpu.memory_space<vmem>>) attributes {dimension_semantics = [#tpu.dimension_semantics<parallel>, #tpu.dimension_semantics<arbitrary>], iteration_bounds = array<i64: 2, 3>, scalar_prefetch = 0 : i64, scratch_operands = 0 : i64, tpu.core_type = #tpu.core_type<tc>, window_params = [{transform_indices = @transform_0, window_bounds = array<i64: 32, 1>}, {transform_indices = @transform_1, window_bounds = array<i64: 32, 128>}, {pipeline_mode = #tpu.pipeline_mode<synchronous>, transform_indices = @transform_2, window_bounds = array<i64: 1, 10>}, {transform_indices = @transform_3, window_bounds = array<i64: 32, 10>}, {transform_indices = @transform_4, window_bounds = array<i64: 1, 32, 1>}, {transform_indices = @transform_5, window_bounds = array<i64: 1, 32, 10>}, {transform_indices = @transform_6, window_bounds = array<i64: 32, 1>}, {transform_indices = @transform_7, window_bounds = array<i64: 32, 1>}]} {
    %c0_i32 = arith.constant 0 : i32
    %0 = arith.cmpi eq, %arg1, %c0_i32 : i32
    %1 = arith.extui %0 : i1 to i32
    %c0_i32_0 = arith.constant 0 : i32
    %2 = arith.cmpi ne, %1, %c0_i32_0 : i32
    scf.if %2 {
      %cst_28 = arith.constant 0.000000e+00 : f32
      %53 = vector.broadcast %cst_28 : f32 to vector<32x1xf32>
      %c0_29 = arith.constant 0 : index
      %c0_30 = arith.constant 0 : index
      %54 = vector.load %arg8[%c0_29, %c0_30] : memref<32x1xf32, #tpu.memory_space<vmem>>, vector<32x1xf32>
      tpu.vector_store %arg8[%c0_29, %c0_30], %53 {strides = array<i32>} : memref<32x1xf32, #tpu.memory_space<vmem>>, vector<32x1xf32>,
      %cst_31 = arith.constant 0.000000e+00 : f32
      %55 = vector.broadcast %cst_31 : f32 to vector<32x1xf32>
      %c0_32 = arith.constant 0 : index
      %c0_33 = arith.constant 0 : index
      %56 = vector.load %arg9[%c0_32, %c0_33] : memref<32x1xf32, #tpu.memory_space<vmem>>, vector<32x1xf32>
      tpu.vector_store %arg9[%c0_32, %c0_33], %55 {strides = array<i32>} : memref<32x1xf32, #tpu.memory_space<vmem>>, vector<32x1xf32>,
    } else {
    }
    %c0 = arith.constant 0 : index
    %c0_1 = arith.constant 0 : index
    %c0_2 = arith.constant 0 : index
    %3 = vector.load %arg7[%c0, %c0_1, %c0_2] : memref<1x32x10xf32, #tpu.memory_space<vmem>>, vector<1x32x10xf32>
    %4 = vector.shape_cast %3 : vector<1x32x10xf32> to vector<32x10xf32>
    %c0_3 = arith.constant 0 : index
    %c0_4 = arith.constant 0 : index
    %5 = vector.load %arg2[%c0_3, %c0_4] : memref<32x1xi32, #tpu.memory_space<vmem>>, vector<32x1xi32>
    %c0_5 = arith.constant 0 : index
    %c0_6 = arith.constant 0 : index
    %6 = vector.load %arg3[%c0_5, %c0_6] : memref<32x128xf32, #tpu.memory_space<vmem>>, vector<32x1xf32>
    %c0_7 = arith.constant 0 : index
    %c1 = arith.constant 1 : index
    %7 = vector.load %arg3[%c0_7, %c1] : memref<32x128xf32, #tpu.memory_space<vmem>>, vector<32x1xf32>
    %c0_8 = arith.constant 0 : index
    %c2 = arith.constant 2 : index
    %8 = vector.load %arg3[%c0_8, %c2] : memref<32x128xf32, #tpu.memory_space<vmem>>, vector<32x1xf32>
    %c0_9 = arith.constant 0 : index
    %c0_10 = arith.constant 0 : index
    %c0_11 = arith.constant 0 : index
    %9 = vector.load %arg6[%c0_9, %c0_10, %c0_11] : memref<1x32x1xf32, #tpu.memory_space<vmem>>, vector<1x32x1xf32>
    %10 = vector.shape_cast %9 : vector<1x32x1xf32> to vector<32x1xf32>
    %11 = tpu.iota {dimensions = array<i32: 1>} : vector<32x10xi32>
    %12 = vector.broadcast %5 : vector<32x1xi32> to vector<32x10xi32>
    %13 = arith.cmpi eq, %11, %12 : vector<32x10xi32>
    %14 = vector.broadcast %6 : vector<32x1xf32> to vector<32x10xf32>
    %15 = arith.subf %4, %14 : vector<32x10xf32>
    %16 = arith.select %13, %15, %4 : vector<32x10xi1>, vector<32x10xf32>
    %cst = arith.constant dense<0xFF800000> : vector<32xf32>
    %17 = vector.multi_reduction <maximumf>, %16, %cst [1] : vector<32x10xf32> to vector<32xf32>
    %18 = vector.shape_cast %17 : vector<32xf32> to vector<32x1xf32>
    %19 = vector.broadcast %18 : vector<32x1xf32> to vector<32x10xf32>
    %20 = arith.subf %16, %19 : vector<32x10xf32>
    %21 = math.exp %20 : vector<32x10xf32>
    %cst_12 = arith.constant dense<0.000000e+00> : vector<32xf32>
    %22 = vector.multi_reduction <add>, %21, %cst_12 [1] : vector<32x10xf32> to vector<32xf32>
    %23 = vector.shape_cast %22 : vector<32xf32> to vector<32x1xf32>
    %24 = math.log %23 : vector<32x1xf32>
    %25 = arith.addf %18, %24 : vector<32x1xf32>
    %c0_13 = arith.constant 0 : index
    %c0_14 = arith.constant 0 : index
    %26 = vector.load %arg8[%c0_13, %c0_14] : memref<32x1xf32, #tpu.memory_space<vmem>>, vector<32x1xf32>
    %27 = arith.subf %10, %6 : vector<32x1xf32>
    %28 = arith.subf %25, %27 : vector<32x1xf32>
    %29 = arith.mulf %7, %28 : vector<32x1xf32>
    %30 = arith.addf %26, %29 : vector<32x1xf32>
    %c0_15 = arith.constant 0 : index
    %c0_16 = arith.constant 0 : index
    %31 = vector.load %arg8[%c0_15, %c0_16] : memref<32x1xf32, #tpu.memory_space<vmem>>, vector<32x1xf32>
    tpu.vector_store %arg8[%c0_15, %c0_16], %30 {strides = array<i32>} : memref<32x1xf32, #tpu.memory_space<vmem>>, vector<32x1xf32>,
    %c0_17 = arith.constant 0 : index
    %c0_18 = arith.constant 0 : index
    %32 = vector.load %arg4[%c0_17, %c0_18] : memref<1x10xf32, #tpu.memory_space<vmem>>, vector<1x10xf32>
    %33 = vector.broadcast %32 : vector<1x10xf32> to vector<32x10xf32>
    %34 = arith.mulf %4, %33 : vector<32x10xf32>
    %cst_19 = arith.constant dense<0xFF800000> : vector<32xf32>
    %35 = vector.multi_reduction <maximumf>, %34, %cst_19 [1] : vector<32x10xf32> to vector<32xf32>
    %36 = vector.shape_cast %35 : vector<32xf32> to vector<32x1xf32>
    %37 = vector.broadcast %36 : vector<32x1xf32> to vector<32x10xf32>
    %38 = arith.subf %34, %37 : vector<32x10xf32>
    %39 = math.exp %38 : vector<32x10xf32>
    %cst_20 = arith.constant dense<0.000000e+00> : vector<32xf32>
    %40 = vector.multi_reduction <add>, %39, %cst_20 [1] : vector<32x10xf32> to vector<32xf32>
    %41 = vector.shape_cast %40 : vector<32xf32> to vector<32x1xf32>
    %42 = math.log %41 : vector<32x1xf32>
    %43 = arith.addf %36, %42 : vector<32x1xf32>
    %c0_21 = arith.constant 0 : index
    %c0_22 = arith.constant 0 : index
    %44 = vector.load %arg9[%c0_21, %c0_22] : memref<32x1xf32, #tpu.memory_space<vmem>>, vector<32x1xf32>
    %c0_23 = arith.constant 0 : index
    %c0_24 = arith.constant 0 : index
    %45 = vector.load %arg5[%c0_23, %c0_24] : memref<32x10xf32, #tpu.memory_space<vmem>>, vector<32x10xf32>
    %46 = arith.mulf %45, %34 : vector<32x10xf32>
    %cst_25 = arith.constant dense<0.000000e+00> : vector<32xf32>
    %47 = vector.multi_reduction <add>, %46, %cst_25 [1] : vector<32x10xf32> to vector<32xf32>
    %48 = vector.shape_cast %47 : vector<32xf32> to vector<32x1xf32>
    %49 = arith.mulf %43, %8 : vector<32x1xf32>
    %50 = arith.subf %48, %49 : vector<32x1xf32>
    %51 = arith.addf %44, %50 : vector<32x1xf32>
    %c0_26 = arith.constant 0 : index
    %c0_27 = arith.constant 0 : index
    %52 = vector.load %arg9[%c0_26, %c0_27] : memref<32x1xf32, #tpu.memory_space<vmem>>, vector<32x1xf32>
    tpu.vector_store %arg9[%c0_26, %c0_27], %51 {strides = array<i32>} : memref<32x1xf32, #tpu.memory_space<vmem>>, vector<32x1xf32>,
    return
  }
  func.func @transform_0(%arg0: i32, %arg1: i32) -> (i32, i32) {
    %c0_i32 = arith.constant 0 : i32
    %c0_i32_0 = arith.constant 0 : i32
    return %arg0, %c0_i32 : i32, i32
  }
  func.func @transform_1(%arg0: i32, %arg1: i32) -> (i32, i32) {
    %c0_i32 = arith.constant 0 : i32
    %c0_i32_0 = arith.constant 0 : i32
    return %arg0, %c0_i32 : i32, i32
  }
  func.func @transform_2(%arg0: i32, %arg1: i32) -> (i32, i32) {
    %c0_i32 = arith.constant 0 : i32
    %c0_i32_0 = arith.constant 0 : i32
    %c0_i32_1 = arith.constant 0 : i32
    return %c0_i32, %c0_i32_0 : i32, i32
  }
  func.func @transform_3(%arg0: i32, %arg1: i32) -> (i32, i32) {
    %c0_i32 = arith.constant 0 : i32
    %c0_i32_0 = arith.constant 0 : i32
    return %arg0, %c0_i32 : i32, i32
  }
  func.func @transform_4(%arg0: i32, %arg1: i32) -> (i32, i32, i32) {
    %c0_i32 = arith.constant 0 : i32
    %c0_i32_0 = arith.constant 0 : i32
    return %arg1, %arg0, %c0_i32 : i32, i32, i32
  }
  func.func @transform_5(%arg0: i32, %arg1: i32) -> (i32, i32, i32) {
    %c0_i32 = arith.constant 0 : i32
    %c0_i32_0 = arith.constant 0 : i32
    return %arg1, %arg0, %c0_i32 : i32, i32, i32
  }
  func.func @transform_6(%arg0: i32, %arg1: i32) -> (i32, i32) {
    %c0_i32 = arith.constant 0 : i32
    %c0_i32_0 = arith.constant 0 : i32
    return %arg0, %c0_i32 : i32, i32
  }
  func.func @transform_7(%arg0: i32, %arg1: i32) -> (i32, i32) {
    %c0_i32 = arith.constant 0 : i32
    %c0_i32_0 = arith.constant 0 : i32
    return %arg0, %c0_i32 : i32, i32
  }
}

</mosaic_0001>

<llo_original>
// kernel: tpu_custom_call.1
$region0: #{tpu_custom_call.1}
  #allocation0 [shape = 'u32[]', space=smem, size = 0x4, offset = 0x4, fixed_abs, tag = 'smem constant byte address 0x4 - core index']
  #allocation1 [shape = 'u32[144,128]{1,0:T(1,128)}', space=vmem, size = 0x12000, scoped, tag = 'internal scratch']
  %s0 = inlined_call_operand.vmem [shape: s32[64,1], index: 0, kind: input, shape index: {}]
  %s1 = inlined_call_operand.vmem [shape: f32[64,128], index: 1, kind: input, shape index: {}]
  %s2 = inlined_call_operand.vmem [shape: f32[1,10], index: 2, kind: input, shape index: {}]
  %s3 = inlined_call_operand.vmem [shape: f32[64,10], index: 3, kind: input, shape index: {}]
  %s4 = inlined_call_operand.vmem [shape: f32[3,64,1], index: 4, kind: input, shape index: {}]
  %s5 = inlined_call_operand.vmem [shape: f32[3,64,10], index: 5, kind: input, shape index: {}]
  %s6 = inlined_call_operand.vmem [shape: f32[64,1], index: 6, kind: output, shape index: {0}]
  %s7 = inlined_call_operand.vmem [shape: f32[64,1], index: 7, kind: output, shape index: {1}]
  %8 = xla_tuple %s6, %s7
  %s9 = sld [smem:[#allocation0]]
  $region69: #{tpu_custom_call.1} parent=0
    _
  %s11 = ssub.s32 1, %s9
  %s12 = scalar_select 0, %s11, %s9
  loop: start=0, step=1, limit=8
  $region2: #{tpu_custom_call.1} parent=0 // loop_pre_header
    _
  $region3: #{tpu_custom_call.1} parent=0 // loop_header
    %s14 = sphi 0, %s18
    %p15 = scmp.ge.s32.totalorder %s14, 8
    %s21 = sphi 0, %s33
    %s22 = sphi 0, %s29
    %s23 = sphi 0, %s21
    %s24 = sphi 0, %s22
    %s25 = sphi 0, %s23
    %s26 = sphi 0, %s24
    %s36 = sphi 0, %s38
    %s39 = sphi 0, %s36
    %s40 = sphi 0, %s39
    %s56 = sphi 0, %s40
    %s62 = sphi 0, %s64
    %s65 = sphi 0, %s62
    %s66 = sphi 0, %s65
    %s82 = sphi 0, %s66
    %s86 = sphi 0, %s86
    %s88 = sphi 0, %s86
    %s89 = sphi 0, %s88
    %s103 = sphi 0, %s89
    %s109 = sphi 0, %s111
    %s112 = sphi 0, %s109
    %s113 = sphi 0, %s112
    %s129 = sphi 0, %s113
    %s137 = sphi 0, %s139
    %s140 = sphi 0, %s137
    %s141 = sphi 0, %s140
    %s157 = sphi 0, %s141
    %s165 = sphi 0, %s167
    %s168 = sphi 0, %s165
    %s169 = sphi 0, %s168
    %s185 = sphi 0, %s169
    %s191 = sphi 0, %s193
    %s194 = sphi 0, %s191
    %s195 = sphi 0, %s194
    %s211 = sphi 0, %s195
    %s217 = sphi 0, %s219
    %s220 = sphi 0, %s217
    %s221 = sphi 0, %s220
    %s237 = sphi 0, %s221
  $region4: #{tpu_custom_call.1} parent=0 // loop_header_branch
    %17 = sbr.rel (%p15) target = $region8
  $region5: #{tpu_custom_call.1} parent=0 // loop_body
    %s19 = ssub.s32 %s14, 1
    %s20 = ssub.s32 %s14, 2
    %s27 = sadd.s32 1, %s22
    %p28 = scmp.ge.s32.totalorder %s27, 3
    %s29 = scalar_select %p28, 0, %s27
    %s30 = sadd.s32 1, %s21
    %s31 = scalar_select %p28, %s30, %s21
    %p32 = scmp.ge.s32.totalorder %s31, 2
    %s33 = scalar_select %p32, 0, %s31
    %s34 = ssub.s32 %s21, %s33
    %p35 = scmp.eq.s32.totalorder %s34, 0
    %s37 = sadd.s32 %s36, 1
    %s38 = scalar_select %p35, %s36, %s37
    %p41 = pneg %p35
    %p42 = scmp.eq.s32.totalorder %s14, 5
    %p43 = por %p41, %p42
    %p44 = scmp.ne.s32.totalorder %s36, %s39
    %p45 = scmp.eq.s32.totalorder %s14, 0
    %p46 = por %p44, %p45
    %p47 = scmp.ne.s32.totalorder %s36, %s39
    %p48 = scmp.eq.s32.totalorder %s19, 5
    %p49 = por %p47, %p48
    %p50 = scmp.ne.s32.totalorder %s39, %s40
    %p51 = scmp.eq.s32.totalorder %s19, 0
    %p52 = por %p50, %p51
    %p53 = scmp.ne.s32.totalorder %s39, %s40
    %p54 = scmp.eq.s32.totalorder %s20, 5
    %p55 = por %p53, %p54
    %p57 = scmp.ne.s32.totalorder %s40, %s56
    %p58 = scmp.eq.s32.totalorder %s20, 0
    %p59 = por %p57, %p58
    %s60 = ssub.s32 %s21, %s33
    %p61 = scmp.eq.s32.totalorder %s60, 0
    %s63 = sadd.s32 %s62, 1
    %s64 = scalar_select %p61, %s62, %s63
    %p67 = pneg %p61
    %p68 = scmp.eq.s32.totalorder %s14, 5
    %p69 = por %p67, %p68
    %p70 = scmp.ne.s32.totalorder %s62, %s65
    %p71 = scmp.eq.s32.totalorder %s14, 0
    %p72 = por %p70, %p71
    %p73 = scmp.ne.s32.totalorder %s62, %s65
    %p74 = scmp.eq.s32.totalorder %s19, 5
    %p75 = por %p73, %p74
    %p76 = scmp.ne.s32.totalorder %s65, %s66
    %p77 = scmp.eq.s32.totalorder %s19, 0
    %p78 = por %p76, %p77
    %p79 = scmp.ne.s32.totalorder %s65, %s66
    %p80 = scmp.eq.s32.totalorder %s20, 5
    %p81 = por %p79, %p80
    %p83 = scmp.ne.s32.totalorder %s66, %s82
    %p84 = scmp.eq.s32.totalorder %s20, 0
    %p85 = por %p83, %p84
    %s87 = sadd.s32 %s86, 1
    %p90 = scmp.eq.s32.totalorder %s14, 5
    %p91 = scmp.ne.s32.totalorder %s86, %s88
    %p92 = scmp.eq.s32.totalorder %s14, 0
    %p93 = por %p91, %p92
    %p94 = scmp.ne.s32.totalorder %s86, %s88
    %p95 = scmp.eq.s32.totalorder %s19, 5
    %p96 = por %p94, %p95
    %p97 = scmp.ne.s32.totalorder %s88, %s89
    %p98 = scmp.eq.s32.totalorder %s19, 0
    %p99 = por %p97, %p98
    %p100 = scmp.ne.s32.totalorder %s88, %s89
    %p101 = scmp.eq.s32.totalorder %s20, 5
    %p102 = por %p100, %p101
    %p104 = scmp.ne.s32.totalorder %s89, %s103
    %p105 = scmp.eq.s32.totalorder %s20, 0
    %p106 = por %p104, %p105
    %s107 = ssub.s32 %s21, %s33
    %p108 = scmp.eq.s32.totalorder %s107, 0
    %s110 = sadd.s32 %s109, 1
    %s111 = scalar_select %p108, %s109, %s110
    %p114 = pneg %p108
    %p115 = scmp.eq.s32.totalorder %s14, 5
    %p116 = por %p114, %p115
    %p117 = scmp.ne.s32.totalorder %s109, %s112
    %p118 = scmp.eq.s32.totalorder %s14, 0
    %p119 = por %p117, %p118
    %p120 = scmp.ne.s32.totalorder %s109, %s112
    %p121 = scmp.eq.s32.totalorder %s19, 5
    %p122 = por %p120, %p121
    %p123 = scmp.ne.s32.totalorder %s112, %s113
    %p124 = scmp.eq.s32.totalorder %s19, 0
    %p125 = por %p123, %p124
    %p126 = scmp.ne.s32.totalorder %s112, %s113
    %p127 = scmp.eq.s32.totalorder %s20, 5
    %p128 = por %p126, %p127
    %p130 = scmp.ne.s32.totalorder %s113, %s129
    %p131 = scmp.eq.s32.totalorder %s20, 0
    %p132 = por %p130, %p131
    %s133 = ssub.s32 %s22, %s29
    %s134 = ssub.s32 %s21, %s33
    %s135 = sor.u32 %s133, %s134
    %p136 = scmp.eq.s32.totalorder %s135, 0
    %s138 = sadd.s32 %s137, 1
    %s139 = scalar_select %p136, %s137, %s138
    %p142 = pneg %p136
    %p143 = scmp.eq.s32.totalorder %s14, 5
    %p144 = por %p142, %p143
    %p145 = scmp.ne.s32.totalorder %s137, %s140
    %p146 = scmp.eq.s32.totalorder %s14, 0
    %p147 = por %p145, %p146
    %p148 = scmp.ne.s32.totalorder %s137, %s140
    %p149 = scmp.eq.s32.totalorder %s19, 5
    %p150 = por %p148, %p149
    %p151 = scmp.ne.s32.totalorder %s140, %s141
    %p152 = scmp.eq.s32.totalorder %s19, 0
    %p153 = por %p151, %p152
    %p154 = scmp.ne.s32.totalorder %s140, %s141
    %p155 = scmp.eq.s32.totalorder %s20, 5
    %p156 = por %p154, %p155
    %p158 = scmp.ne.s32.totalorder %s141, %s157
    %p159 = scmp.eq.s32.totalorder %s20, 0
    %p160 = por %p158, %p159
    %s161 = ssub.s32 %s22, %s29
    %s162 = ssub.s32 %s21, %s33
    %s163 = sor.u32 %s161, %s162
    %p164 = scmp.eq.s32.totalorder %s163, 0
    %s166 = sadd.s32 %s165, 1
    %s167 = scalar_select %p164, %s165, %s166
    %p170 = pneg %p164
    %p171 = scmp.eq.s32.totalorder %s14, 5
    %p172 = por %p170, %p171
    %p173 = scmp.ne.s32.totalorder %s165, %s168
    %p174 = scmp.eq.s32.totalorder %s14, 0
    %p175 = por %p173, %p174
    %p176 = scmp.ne.s32.totalorder %s165, %s168
    %p177 = scmp.eq.s32.totalorder %s19, 5
    %p178 = por %p176, %p177
    %p179 = scmp.ne.s32.totalorder %s168, %s169
    %p180 = scmp.eq.s32.totalorder %s19, 0
    %p181 = por %p179, %p180
    %p182 = scmp.ne.s32.totalorder %s168, %s169
    %p183 = scmp.eq.s32.totalorder %s20, 5
    %p184 = por %p182, %p183
    %p186 = scmp.ne.s32.totalorder %s169, %s185
    %p187 = scmp.eq.s32.totalorder %s20, 0
    %p188 = por %p186, %p187
    %s189 = ssub.s32 %s21, %s33
    %p190 = scmp.eq.s32.totalorder %s189, 0
    %s192 = sadd.s32 %s191, 1
    %s193 = scalar_select %p190, %s191, %s192
    %p196 = pneg %p190
    %p197 = scmp.eq.s32.totalorder %s14, 5
    %p198 = por %p196, %p197
    %p199 = scmp.ne.s32.totalorder %s191, %s194
    %p200 = scmp.eq.s32.totalorder %s14, 0
    %p201 = por %p199, %p200
    %p202 = scmp.ne.s32.totalorder %s191, %s194
    %p203 = scmp.eq.s32.totalorder %s19, 5
    %p204 = por %p202, %p203
    %p205 = scmp.ne.s32.totalorder %s194, %s195
    %p206 = scmp.eq.s32.totalorder %s19, 0
    %p207 = por %p205, %p206
    %p208 = scmp.ne.s32.totalorder %s194, %s195
    %p209 = scmp.eq.s32.totalorder %s20, 5
    %p210 = por %p208, %p209
    %p212 = scmp.ne.s32.totalorder %s195, %s211
    %p213 = scmp.eq.s32.totalorder %s20, 0
    %p214 = por %p212, %p213
    %s215 = ssub.s32 %s21, %s33
    %p216 = scmp.eq.s32.totalorder %s215, 0
    %s218 = sadd.s32 %s217, 1
    %s219 = scalar_select %p216, %s217, %s218
    %p222 = pneg %p216
    %p223 = scmp.eq.s32.totalorder %s14, 5
    %p224 = por %p222, %p223
    %p225 = scmp.ne.s32.totalorder %s217, %s220
    %p226 = scmp.eq.s32.totalorder %s14, 0
    %p227 = por %p225, %p226
    %p228 = scmp.ne.s32.totalorder %s217, %s220
    %p229 = scmp.eq.s32.totalorder %s19, 5
    %p230 = por %p228, %p229
    %p231 = scmp.ne.s32.totalorder %s220, %s221
    %p232 = scmp.eq.s32.totalorder %s19, 0
    %p233 = por %p231, %p232
    %p234 = scmp.ne.s32.totalorder %s220, %s221
    %p235 = scmp.eq.s32.totalorder %s20, 5
    %p236 = por %p234, %p235
    %p238 = scmp.ne.s32.totalorder %s221, %s237
    %p239 = scmp.eq.s32.totalorder %s20, 0
    %p240 = por %p238, %p239
    %p241 = scmp.le.s32.totalorder 1, %s14
    %p242 = scmp.lt.s32.totalorder %s14, 7
    %p243 = pnand %p241, %p242
    %p244 = pneg %p243
    // Predicated region
    $region9: #{tpu_custom_call.1} parent=5 // pred_check
      _
    $region10: #{tpu_custom_call.1} parent=5 // pred_check_branch
      %246 = sbr.rel (%p243) target = $region12
    $region11: #{tpu_custom_call.1} parent=5 // pred_region
      %s247 = ssub.s32 %s14, 1
      // Predicated region
      $region13: #{tpu_custom_call.1} parent=11 // pred_check
        %p248 = pneg %p99
      $region14: #{tpu_custom_call.1} parent=11 // pred_check_branch
        %250 = sbr.rel (%p248) target = $region16
      $region15: #{tpu_custom_call.1} parent=11 // pred_region
        _
      $region16: #{tpu_custom_call.1} parent=11 // pred_fallthru
        _
    $region12: #{tpu_custom_call.1} parent=5 // pred_fallthru
      _
    %p251 = scmp.lt.s32.totalorder %s14, 6
    // Predicated region
    $region17: #{tpu_custom_call.1} parent=5 // pred_check
      %p252 = pneg %p251
    $region18: #{tpu_custom_call.1} parent=5 // pred_check_branch
      %254 = sbr.rel (%p252) target = $region20
    $region19: #{tpu_custom_call.1} parent=5 // pred_region
      // Predicated region
      $region21: #{tpu_custom_call.1} parent=19 // pred_check
        %p255 = pneg %p46
      $region22: #{tpu_custom_call.1} parent=19 // pred_check_branch
        %257 = sbr.rel (%p255) target = $region24
      $region23: #{tpu_custom_call.1} parent=19 // pred_region
        %s258 = smul.u32 4, %s21
        %p259 = scmp.lt.s32.totalorder %s258, 7
        %s260 = scalar_select %p259, %s258, 7
        %s261 = smul.addr %s260, 8
        %s262 = scalar_lea.vmem %s0, %s261
        %s263 = smul.u32 4, %s21
      $region24: #{tpu_custom_call.1} parent=19 // pred_fallthru
        _
      // Predicated region
      $region25: #{tpu_custom_call.1} parent=19 // pred_check
        %p264 = pneg %p72
      $region26: #{tpu_custom_call.1} parent=19 // pred_check_branch
        %266 = sbr.rel (%p264) target = $region28
      $region27: #{tpu_custom_call.1} parent=19 // pred_region
        %s267 = smul.u32 4, %s21
        %p268 = scmp.lt.s32.totalorder %s267, 7
        %s269 = scalar_select %p268, %s267, 7
        %s270 = smul.addr %s269, 8
        %s271 = scalar_lea.vmem %s1, %s270
        %s272 = smul.u32 4, %s21
      $region28: #{tpu_custom_call.1} parent=19 // pred_fallthru
        _
      // Predicated region
      $region29: #{tpu_custom_call.1} parent=19 // pred_check
        %p273 = pneg %p119
      $region30: #{tpu_custom_call.1} parent=19 // pred_check_branch
        %275 = sbr.rel (%p273) target = $region32
      $region31: #{tpu_custom_call.1} parent=19 // pred_region
        %s276 = smul.u32 4, %s21
        %p277 = scmp.lt.s32.totalorder %s276, 7
        %s278 = scalar_select %p277, %s276, 7
        %s279 = smul.addr %s278, 8
        %s280 = scalar_lea.vmem %s3, %s279
        %s281 = smul.u32 4, %s21
      $region32: #{tpu_custom_call.1} parent=19 // pred_fallthru
        _
      // Predicated region
      $region33: #{tpu_custom_call.1} parent=19 // pred_check
        %p282 = pneg %p147
      $region34: #{tpu_custom_call.1} parent=19 // pred_check_branch
        %284 = sbr.rel (%p282) target = $region36
      $region35: #{tpu_custom_call.1} parent=19 // pred_region
        %s285 = smul.u32 4, %s21
        %p286 = scmp.lt.s32.totalorder %s22, 2
        %s287 = scalar_select %p286, %s22, 2
        %p288 = scmp.lt.s32.totalorder %s285, 7
        %s289 = scalar_select %p288, %s285, 7
        %s290 = smul.addr %s287, 8
        %s291 = sadd.s32 %s289, %s290
        %s292 = smul.addr %s291, 8
        %s293 = scalar_lea.vmem %s4, %s292
        %s294 = smul.u32 4, %s21
      $region36: #{tpu_custom_call.1} parent=19 // pred_fallthru
        _
      // Predicated region
      $region37: #{tpu_custom_call.1} parent=19 // pred_check
        %p295 = pneg %p175
      $region38: #{tpu_custom_call.1} parent=19 // pred_check_branch
        %297 = sbr.rel (%p295) target = $region40
      $region39: #{tpu_custom_call.1} parent=19 // pred_region
        %s298 = smul.u32 4, %s21
        %p299 = scmp.lt.s32.totalorder %s22, 2
        %s300 = scalar_select %p299, %s22, 2
        %p301 = scmp.lt.s32.totalorder %s298, 7
        %s302 = scalar_select %p301, %s298, 7
        %s303 = smul.addr %s300, 8
        %s304 = sadd.s32 %s302, %s303
        %s305 = smul.addr %s304, 8
        %s306 = scalar_lea.vmem %s5, %s305
        %s307 = smul.u32 4, %s21
      $region40: #{tpu_custom_call.1} parent=19 // pred_fallthru
        _
    $region20: #{tpu_custom_call.1} parent=5 // pred_fallthru
      _
    %p308 = scmp.le.s32.totalorder 1, %s14
    %p309 = scmp.lt.s32.totalorder %s14, 7
    %p310 = pnand %p308, %p309
    %p311 = pneg %p310
    // Predicated region
    $region41: #{tpu_custom_call.1} parent=5 // pred_check
      _
    $region42: #{tpu_custom_call.1} parent=5 // pred_check_branch
      %313 = sbr.rel (%p310) target = $region44
    $region43: #{tpu_custom_call.1} parent=5 // pred_region
      %s314 = ssub.s32 %s14, 1
      %s315 = smul.u32 4, %s23
      %p316 = scmp.lt.s32.totalorder %s315, 7
      %s317 = scalar_select %p316, %s315, 7
      %s318 = smul.addr %s317, 8
      %s319 = scalar_lea.vmem %s0, %s318
      %p320 = pneg %p52
      %p321 = pneg %p49
      %s322 = smul.u32 4, %s23
      %p323 = scmp.lt.s32.totalorder %s322, 7
      %s324 = scalar_select %p323, %s322, 7
      %s325 = smul.addr %s324, 8
      %s326 = scalar_lea.vmem %s1, %s325
      %p327 = pneg %p78
      %p328 = pneg %p75
      %p329 = pneg %p99
      %p330 = pneg %p96
      %s331 = smul.u32 4, %s23
      %p332 = scmp.lt.s32.totalorder %s331, 7
      %s333 = scalar_select %p332, %s331, 7
      %s334 = smul.addr %s333, 8
      %s335 = scalar_lea.vmem %s3, %s334
      %p336 = pneg %p125
      %p337 = pneg %p122
      %s338 = smul.u32 4, %s23
      %p339 = scmp.lt.s32.totalorder %s24, 2
      %s340 = scalar_select %p339, %s24, 2
      %p341 = scmp.lt.s32.totalorder %s338, 7
      %s342 = scalar_select %p341, %s338, 7
      %s343 = smul.addr %s340, 8
      %s344 = sadd.s32 %s342, %s343
      %s345 = smul.addr %s344, 8
      %s346 = scalar_lea.vmem %s4, %s345
      %p347 = pneg %p153
      %p348 = pneg %p150
      %s349 = smul.u32 4, %s23
      %p350 = scmp.lt.s32.totalorder %s24, 2
      %s351 = scalar_select %p350, %s24, 2
      %p352 = scmp.lt.s32.totalorder %s349, 7
      %s353 = scalar_select %p352, %s349, 7
      %s354 = smul.addr %s351, 8
      %s355 = sadd.s32 %s353, %s354
      %s356 = smul.addr %s355, 8
      %s357 = scalar_lea.vmem %s5, %s356
      %p358 = pneg %p181
      %p359 = pneg %p178
      %p360 = pneg %p207
      %p361 = pneg %p204
      %s362 = smul.u32 4, %s23
      %p363 = scmp.lt.s32.totalorder %s362, 7
      %s364 = scalar_select %p363, %s362, 7
      %s365 = smul.addr %s364, 8
      %s366 = scalar_lea.vmem %s6, %s365
      %p367 = pneg %p233
      %p368 = pneg %p230
      %s369 = smul.u32 4, %s23
      %p370 = scmp.lt.s32.totalorder %s369, 7
      %s371 = scalar_select %p370, %s369, 7
      %s372 = smul.addr %s371, 8
      %s373 = scalar_lea.vmem %s7, %s372
      %s374 = smul.u32 4, %s23
      %p375 = scmp.lt.s32.totalorder %s374, 7
      %s376 = scalar_select %p375, %s374, 7
      %s377 = smul.addr %s376, 8
      %s378 = scalar_lea.vmem %s0, %s377
      %s379 = smul.u32 4, %s23
      %s380 = smul.u32 4, %s23
      %p381 = scmp.lt.s32.totalorder %s380, 7
      %s382 = scalar_select %p381, %s380, 7
      %s383 = smul.addr %s382, 8
      %s384 = scalar_lea.vmem %s1, %s383
      %s385 = smul.u32 4, %s23
      %s386 = smul.u32 4, %s23
      %p387 = scmp.lt.s32.totalorder %s386, 7
      %s388 = scalar_select %p387, %s386, 7
      %s389 = smul.addr %s388, 8
      %s390 = scalar_lea.vmem %s3, %s389
      %s391 = smul.u32 4, %s23
      %s392 = smul.u32 4, %s23
      %p393 = scmp.lt.s32.totalorder %s24, 2
      %s394 = scalar_select %p393, %s24, 2
      %p395 = scmp.lt.s32.totalorder %s392, 7
      %s396 = scalar_select %p395, %s392, 7
      %s397 = smul.addr %s394, 8
      %s398 = sadd.s32 %s396, %s397
      %s399 = smul.addr %s398, 8
      %s400 = scalar_lea.vmem %s4, %s399
      %s401 = smul.u32 4, %s23
      %s402 = smul.u32 4, %s23
      %p403 = scmp.lt.s32.totalorder %s24, 2
      %s404 = scalar_select %p403, %s24, 2
      %p405 = scmp.lt.s32.totalorder %s402, 7
      %s406 = scalar_select %p405, %s402, 7
      %s407 = smul.addr %s404, 8
      %s408 = sadd.s32 %s406, %s407
      %s409 = smul.addr %s408, 8
      %s410 = scalar_lea.vmem %s5, %s409
      %s411 = smul.u32 4, %s23
      %s412 = smul.u32 4, %s23
      %p413 = scmp.lt.s32.totalorder %s412, 7
      %s414 = scalar_select %p413, %s412, 7
      %s415 = smul.addr %s414, 8
      %s416 = scalar_lea.vmem %s6, %s415
      %s417 = smul.u32 4, %s23
      %s418 = smul.u32 4, %s23
      %p419 = scmp.lt.s32.totalorder %s418, 7
      %s420 = scalar_select %p419, %s418, 7
      %s421 = smul.addr %s420, 8
      %s422 = scalar_lea.vmem %s7, %s421
      %s423 = smul.u32 4, %s23
      %p424 = scmp.eq.s32.totalorder %s24, 0
      // Predicated region
      $region45: #{tpu_custom_call.1} parent=43 // pred_check
        %p425 = pneg %p424
      $region46: #{tpu_custom_call.1} parent=43 // pred_check_branch
        %427 = sbr.rel (%p425) target = $region48
      $region47: #{tpu_custom_call.1} parent=43 // pred_region
        %vm428 = vcmask 7168
        %429 = vst.msk [vmem:[%s416] sm:$0xff] %vm428, 0.0
        %430 = vst.msk [vmem:[%s416 + $0x8] sm:$0xff] %vm428, 0.0
        %431 = vst.msk [vmem:[%s416 + $0x10] sm:$0xff] %vm428, 0.0
        %432 = vst.msk [vmem:[%s416 + $0x18] sm:$0xff] %vm428, 0.0
        %433 = vst.msk [vmem:[%s422] sm:$0xff] %vm428, 0.0
        %434 = vst.msk [vmem:[%s422 + $0x8] sm:$0xff] %vm428, 0.0
        %435 = vst.msk [vmem:[%s422 + $0x10] sm:$0xff] %vm428, 0.0
        %436 = vst.msk [vmem:[%s422 + $0x18] sm:$0xff] %vm428, 0.0
      $region48: #{tpu_custom_call.1} parent=43 // pred_fallthru
        _
      %v437 = vld [vmem:[%s410] sm:$0xff]
      %v438 = vld [vmem:[%s410 + $0x8] sm:$0xff]
      %v439 = vld [vmem:[%s410 + $0x10] sm:$0xff]
      %v440 = vld [vmem:[%s410 + $0x18] sm:$0xff]
      %v441 = vld [vmem:[%s378] sm:$0xff]
      %v442 = vld [vmem:[%s378 + $0x8] sm:$0xff]
      %v443 = vld [vmem:[%s378 + $0x10] sm:$0xff]
      %v444 = vld [vmem:[%s378 + $0x18] sm:$0xff]
      %v445 = vld [vmem:[%s384] sm:$0xff]
      %v446 = vld [vmem:[%s384 + $0x8] sm:$0xff]
      %v447 = vld [vmem:[%s384 + $0x10] sm:$0xff]
      %v448 = vld [vmem:[%s384 + $0x18] sm:$0xff]
      %v449 = vld [vmem:[%s400] sm:$0xff]
      %v450 = vld [vmem:[%s400 + $0x8] sm:$0xff]
      %v451 = vld [vmem:[%s400 + $0x10] sm:$0xff]
      %v452 = vld [vmem:[%s400 + $0x18] sm:$0xff]
      %v453 = vlaneseq
      %v454 = vand.u32 %v453, 127
      %455 = vset.pattern.permute.xlu0 0
      %456 = vperm.xlu0 %455, %v441
      %v457 = vpop.permute.xlu0 %456
      %458 = vset.pattern.permute.xlu0 0
      %459 = vperm.xlu0 %458, %v442
      %v460 = vpop.permute.xlu0 %459
      %461 = vset.pattern.permute.xlu0 0
      %462 = vperm.xlu0 %461, %v443
      %v463 = vpop.permute.xlu0 %462
      %464 = vset.pattern.permute.xlu0 0
      %465 = vperm.xlu0 %464, %v444
      %v466 = vpop.permute.xlu0 %465
      %vm467 = vcmp.eq.s32.totalorder %v454, %v457
      %vm468 = vcmp.eq.s32.totalorder %v454, %v460
      %vm469 = vcmp.eq.s32.totalorder %v454, %v463
      %vm470 = vcmp.eq.s32.totalorder %v454, %v466
      %472 = vset.pattern.permute.xlu0 0
      %473 = vperm.xlu0 %472, %v445
      %v474 = vpop.permute.xlu0 %473
      %477 = vset.pattern.permute.xlu0 0
      %478 = vperm.xlu0 %477, %v446
      %v479 = vpop.permute.xlu0 %478
      %482 = vset.pattern.permute.xlu0 0
      %483 = vperm.xlu0 %482, %v447
      %v484 = vpop.permute.xlu0 %483
      %487 = vset.pattern.permute.xlu0 0
      %488 = vperm.xlu0 %487, %v448
      %v489 = vpop.permute.xlu0 %488
      %v491 = vsub.f32 %v437, %v474
      %v492 = vsub.f32 %v438, %v479
      %v493 = vsub.f32 %v439, %v484
      %v494 = vsub.f32 %v440, %v489
      %v495 = vsel %vm467, %v491, %v437
      %v496 = vsel %vm468, %v492, %v438
      %v497 = vsel %vm469, %v493, %v439
      %v498 = vsel %vm470, %v494, %v440
      %vm499 = vcmask 80896
      %v500 = vsel %vm499, %v495, -inf
      %501 = vmax.xlane.f32.xlu0 %v500
      %v502 = vpop.xlane.xlu0 %501
      %v503 = vsel %vm499, %v496, -inf
      %504 = vmax.xlane.f32.xlu0 %v503
      %v505 = vpop.xlane.xlu0 %504
      %v506 = vsel %vm499, %v497, -inf
      %507 = vmax.xlane.f32.xlu0 %v506
      %v508 = vpop.xlane.xlu0 %507
      %v509 = vsel %vm499, %v498, -inf
      %510 = vmax.xlane.f32.xlu0 %v509
      %v511 = vpop.xlane.xlu0 %510
      %v512 = vsub.f32 %v495, %v502
      %v513 = vsub.f32 %v496, %v505
      %v514 = vsub.f32 %v497, %v508
      %v515 = vsub.f32 %v498, %v511
      %v516 = vmul.f32 %v512, 1.442695
      %v517 = vpow.pop %v516
      %v518 = vmul.f32 %v513, 1.442695
      %v519 = vpow.pop %v518
      %v520 = vmul.f32 %v514, 1.442695
      %v521 = vpow.pop %v520
      %v522 = vmul.f32 %v515, 1.442695
      %v523 = vpow.pop %v522
      %v524 = vsel %vm499, %v517, 0.0
      %525 = vadd.xlane.f32.xlu0 %v524
      %v526 = vpop.xlane.xlu0 %525
      %v527 = vsel %vm499, %v519, 0.0
      %528 = vadd.xlane.f32.xlu0 %v527
      %v529 = vpop.xlane.xlu0 %528
      %v530 = vsel %vm499, %v521, 0.0
      %531 = vadd.xlane.f32.xlu0 %v530
      %v532 = vpop.xlane.xlu0 %531
      %v533 = vsel %vm499, %v523, 0.0
      %534 = vadd.xlane.f32.xlu0 %v533
      %v535 = vpop.xlane.xlu0 %534
      %v536 = vlog2.pop %v526
      %v537 = vmul.f32 %v536, 0.6931472
      %v538 = vlog2.pop %v529
      %v539 = vmul.f32 %v538, 0.6931472
      %v540 = vlog2.pop %v532
      %v541 = vmul.f32 %v540, 0.6931472
      %v542 = vlog2.pop %v535
      %v543 = vmul.f32 %v542, 0.6931472
      %v544 = vadd.f32 %v502, %v537
      %v545 = vadd.f32 %v505, %v539
      %v546 = vadd.f32 %v508, %v541
      %v547 = vadd.f32 %v511, %v543
      %v548 = vld [vmem:[%s416] sm:$0xff]
      %v549 = vld [vmem:[%s416 + $0x8] sm:$0xff]
      %v550 = vld [vmem:[%s416 + $0x10] sm:$0xff]
      %v551 = vld [vmem:[%s416 + $0x18] sm:$0xff]
      %v552 = vsub.f32 %v449, %v445
      %v553 = vsub.f32 %v450, %v446
      %v554 = vsub.f32 %v451, %v447
      %v555 = vsub.f32 %v452, %v448
      %v556 = vsub.f32 %v544, %v552
      %v557 = vsub.f32 %v545, %v553
      %v558 = vsub.f32 %v546, %v554
      %v559 = vsub.f32 %v547, %v555
      %564 = vrot.lane.b32.xlu0 %v556, 1
      %v565 = vpop.permute.xlu0 %564
      %566 = vrot.lane.b32.xlu0 %v557, 1
      %v567 = vpop.permute.xlu0 %566
      %568 = vrot.lane.b32.xlu0 %v558, 1
      %v569 = vpop.permute.xlu0 %568
      %570 = vrot.lane.b32.xlu0 %v559, 1
      %v571 = vpop.permute.xlu0 %570
      %v576 = vmul.f32 %v445, %v565
      %v577 = vmul.f32 %v446, %v567
      %v578 = vmul.f32 %v447, %v569
      %v579 = vmul.f32 %v448, %v571
      %584 = vrot.lane.b32.xlu0 %v576, 127
      %v585 = vpop.permute.xlu0 %584
      %586 = vrot.lane.b32.xlu0 %v577, 127
      %v587 = vpop.permute.xlu0 %586
      %588 = vrot.lane.b32.xlu0 %v578, 127
      %v589 = vpop.permute.xlu0 %588
      %590 = vrot.lane.b32.xlu0 %v579, 127
      %v591 = vpop.permute.xlu0 %590
      %v596 = vadd.f32 %v548, %v585
      %v597 = vadd.f32 %v549, %v587
      %v598 = vadd.f32 %v550, %v589
      %v599 = vadd.f32 %v551, %v591
      %vm600 = vcmask 7168
      %601 = vst.msk [vmem:[%s416] sm:$0xff] %vm600, %v596
      %602 = vst.msk [vmem:[%s416 + $0x8] sm:$0xff] %vm600, %v597
      %603 = vst.msk [vmem:[%s416 + $0x10] sm:$0xff] %vm600, %v598
      %604 = vst.msk [vmem:[%s416 + $0x18] sm:$0xff] %vm600, %v599
      %v605 = vld [vmem:[%s2] sm:$0x1]
      %v607 = vlaneseq
      %v608 = vshrl.u32 %v607, 7
      %v609 = vsub.s32 0, %v608
      %v610 = vrot.slane %v605, %v609
      %v612 = vmul.f32 %v437, %v610
      %v613 = vmul.f32 %v438, %v610
      %v614 = vmul.f32 %v439, %v610
      %v615 = vmul.f32 %v440, %v610
      %v616 = vsel %vm499, %v612, -inf
      %617 = vmax.xlane.f32.xlu0 %v616
      %v618 = vpop.xlane.xlu0 %617
      %v619 = vsel %vm499, %v613, -inf
      %620 = vmax.xlane.f32.xlu0 %v619
      %v621 = vpop.xlane.xlu0 %620
      %v622 = vsel %vm499, %v614, -inf
      %623 = vmax.xlane.f32.xlu0 %v622
      %v624 = vpop.xlane.xlu0 %623
      %v625 = vsel %vm499, %v615, -inf
      %626 = vmax.xlane.f32.xlu0 %v625
      %v627 = vpop.xlane.xlu0 %626
      %v628 = vsub.f32 %v612, %v618
      %v629 = vsub.f32 %v613, %v621
      %v630 = vsub.f32 %v614, %v624
      %v631 = vsub.f32 %v615, %v627
      %v632 = vmul.f32 %v628, 1.442695
      %v633 = vpow.pop %v632
      %v634 = vmul.f32 %v629, 1.442695
      %v635 = vpow.pop %v634
      %v636 = vmul.f32 %v630, 1.442695
      %v637 = vpow.pop %v636
      %v638 = vmul.f32 %v631, 1.442695
      %v639 = vpow.pop %v638
      %v640 = vsel %vm499, %v633, 0.0
      %641 = vadd.xlane.f32.xlu0 %v640
      %v642 = vpop.xlane.xlu0 %641
      %v643 = vsel %vm499, %v635, 0.0
      %644 = vadd.xlane.f32.xlu0 %v643
      %v645 = vpop.xlane.xlu0 %644
      %v646 = vsel %vm499, %v637, 0.0
      %647 = vadd.xlane.f32.xlu0 %v646
      %v648 = vpop.xlane.xlu0 %647
      %v649 = vsel %vm499, %v639, 0.0
      %650 = vadd.xlane.f32.xlu0 %v649
      %v651 = vpop.xlane.xlu0 %650
      %v652 = vlog2.pop %v642
      %v653 = vmul.f32 %v652, 0.6931472
      %v654 = vlog2.pop %v645
      %v655 = vmul.f32 %v654, 0.6931472
      %v656 = vlog2.pop %v648
      %v657 = vmul.f32 %v656, 0.6931472
      %v658 = vlog2.pop %v651
      %v659 = vmul.f32 %v658, 0.6931472
      %v660 = vadd.f32 %v618, %v653
      %v661 = vadd.f32 %v621, %v655
      %v662 = vadd.f32 %v624, %v657
      %v663 = vadd.f32 %v627, %v659
      %v664 = vld [vmem:[%s422] sm:$0xff]
      %v665 = vld [vmem:[%s422 + $0x8] sm:$0xff]
      %v666 = vld [vmem:[%s422 + $0x10] sm:$0xff]
      %v667 = vld [vmem:[%s422 + $0x18] sm:$0xff]
      %v668 = vld [vmem:[%s390] sm:$0xff]
      %v669 = vld [vmem:[%s390 + $0x8] sm:$0xff]
      %v670 = vld [vmem:[%s390 + $0x10] sm:$0xff]
      %v671 = vld [vmem:[%s390 + $0x18] sm:$0xff]
      %v672 = vmul.f32 %v668, %v612
      %v673 = vmul.f32 %v669, %v613
      %v674 = vmul.f32 %v670, %v614
      %v675 = vmul.f32 %v671, %v615
      %v676 = vsel %vm499, %v672, 0.0
      %677 = vadd.xlane.f32.xlu0 %v676
      %v678 = vpop.xlane.xlu0 %677
      %v679 = vsel %vm499, %v673, 0.0
      %680 = vadd.xlane.f32.xlu0 %v679
      %v681 = vpop.xlane.xlu0 %680
      %v682 = vsel %vm499, %v674, 0.0
      %683 = vadd.xlane.f32.xlu0 %v682
      %v684 = vpop.xlane.xlu0 %683
      %v685 = vsel %vm499, %v675, 0.0
      %686 = vadd.xlane.f32.xlu0 %v685
      %v687 = vpop.xlane.xlu0 %686
      %v688 = vmul.f32 %v660, %v445
      %v689 = vmul.f32 %v661, %v446
      %v690 = vmul.f32 %v662, %v447
      %v691 = vmul.f32 %v663, %v448
      %v692 = vsub.f32 %v678, %v688
      %v693 = vsub.f32 %v681, %v689
      %v694 = vsub.f32 %v684, %v690
      %v695 = vsub.f32 %v687, %v691
      %700 = vrot.lane.b32.xlu0 %v692, 126
      %v701 = vpop.permute.xlu0 %700
      %702 = vrot.lane.b32.xlu0 %v693, 126
      %v703 = vpop.permute.xlu0 %702
      %704 = vrot.lane.b32.xlu0 %v694, 126
      %v705 = vpop.permute.xlu0 %704
      %706 = vrot.lane.b32.xlu0 %v695, 126
      %v707 = vpop.permute.xlu0 %706
      %v712 = vadd.f32 %v664, %v701
      %v713 = vadd.f32 %v665, %v703
      %v714 = vadd.f32 %v666, %v705
      %v715 = vadd.f32 %v667, %v707
      %716 = vst.msk [vmem:[%s422] sm:$0xff] %vm600, %v712
      %717 = vst.msk [vmem:[%s422 + $0x8] sm:$0xff] %vm600, %v713
      %718 = vst.msk [vmem:[%s422 + $0x10] sm:$0xff] %vm600, %v714
      %719 = vst.msk [vmem:[%s422 + $0x18] sm:$0xff] %vm600, %v715
      %s720 = smul.u32 4, %s23
      %p721 = scmp.lt.s32.totalorder %s720, 7
      %s722 = scalar_select %p721, %s720, 7
      %s723 = smul.addr %s722, 8
      %s724 = scalar_lea.vmem %s6, %s723
      %s725 = smul.u32 4, %s23
      %p726 = scmp.lt.s32.totalorder %s725, 7
      %s727 = scalar_select %p726, %s725, 7
      %s728 = smul.addr %s727, 8
      %s729 = scalar_lea.vmem %s7, %s728
      // Predicated region
      $region49: #{tpu_custom_call.1} parent=43 // pred_check
        %p730 = pneg %p204
      $region50: #{tpu_custom_call.1} parent=43 // pred_check_branch
        %732 = sbr.rel (%p730) target = $region52
      $region51: #{tpu_custom_call.1} parent=43 // pred_region
        %s733 = smul.u32 4, %s23
      $region52: #{tpu_custom_call.1} parent=43 // pred_fallthru
        _
      // Predicated region
      $region53: #{tpu_custom_call.1} parent=43 // pred_check
        %p734 = pneg %p230
      $region54: #{tpu_custom_call.1} parent=43 // pred_check_branch
        %736 = sbr.rel (%p734) target = $region56
      $region55: #{tpu_custom_call.1} parent=43 // pred_region
        %s737 = smul.u32 4, %s23
      $region56: #{tpu_custom_call.1} parent=43 // pred_fallthru
        _
    $region44: #{tpu_custom_call.1} parent=5 // pred_fallthru
      _
    %p738 = scmp.le.s32.totalorder 2, %s14
    // Predicated region
    $region57: #{tpu_custom_call.1} parent=5 // pred_check
      %p739 = pneg %p738
    $region58: #{tpu_custom_call.1} parent=5 // pred_check_branch
      %741 = sbr.rel (%p739) target = $region60
    $region59: #{tpu_custom_call.1} parent=5 // pred_region
      %s742 = ssub.s32 %s14, 2
      // Predicated region
      $region61: #{tpu_custom_call.1} parent=59 // pred_check
        %p743 = pneg %p210
      $region62: #{tpu_custom_call.1} parent=59 // pred_check_branch
        %745 = sbr.rel (%p743) target = $region64
      $region63: #{tpu_custom_call.1} parent=59 // pred_region
        %s746 = smul.u32 4, %s25
        %p747 = scmp.lt.s32.totalorder %s746, 7
        %s748 = scalar_select %p747, %s746, 7
        %s749 = smul.addr %s748, 8
        %s750 = scalar_lea.vmem %s6, %s749
      $region64: #{tpu_custom_call.1} parent=59 // pred_fallthru
        _
      // Predicated region
      $region65: #{tpu_custom_call.1} parent=59 // pred_check
        %p751 = pneg %p236
      $region66: #{tpu_custom_call.1} parent=59 // pred_check_branch
        %753 = sbr.rel (%p751) target = $region68
      $region67: #{tpu_custom_call.1} parent=59 // pred_region
        %s754 = smul.u32 4, %s25
        %p755 = scmp.lt.s32.totalorder %s754, 7
        %s756 = scalar_select %p755, %s754, 7
        %s757 = smul.addr %s756, 8
        %s758 = scalar_lea.vmem %s7, %s757
      $region68: #{tpu_custom_call.1} parent=59 // pred_fallthru
        _
    $region60: #{tpu_custom_call.1} parent=5 // pred_fallthru
      _
  $region6: #{tpu_custom_call.1} parent=0 // loop_footer
    %s18 = sadd.s32 1, %s14
  $region7: #{tpu_custom_call.1} parent=0 // loop_footer_branch
    %13 = sbr.rel target = $region3
  $region8: #{tpu_custom_call.1} parent=0 // loop_exit
    _

</llo_original>
